<compile_context>
chip_gen: v5e
topology: v5e:2x2
jax: 0.10.0
libtpu: 0.0.40
codegen_flags: <defaults>
</compile_context>

<pallas_src>
import functools

import jax
import jax.numpy as jnp
from jax.experimental import pallas as pl
from jax.experimental.pallas import tpu as pltpu

_LANES = 128


def _round_up(x, m):
    return (x + m - 1) // m * m


def _vmem_capacity_bytes():
    """Generation-aware VMEM capacity (v5e/v6e: 128 MiB, v7x: 64 MiB)."""
    try:
        info = pltpu.get_tpu_info()
        cap = getattr(info, "vmem_capacity_bytes", None)
        if cap:
            return int(cap)
    except Exception:
        pass
    return 64 * 1024 * 1024  # v7x floor — safe on every generation


def _pick_batch_tile(batch, k, wire_itemsizes, vmem_cap):
    """Pick the batch tile from the *true* per-step VMEM footprint.

    Footprint per batch row ~= K * (2 pipeline buffers x sum(wire bytes)
    + ~4 f32 intermediates materialized by Mosaic (p/z, exp(z), w, w*z).
    """
    per_row = k * (2 * sum(wire_itemsizes) + 4 * 4)
    # Sublane packing: f32 -> 8, bf16 -> 16, int8/fp8 -> 32.
    step = max(8, 32 // min(wire_itemsizes))
    # Keep the working set at <= half of VMEM (and <= 64 MiB on big-VMEM
    # chips) so double buffering + output blocks + code always fit.
    budget = min(vmem_cap // 2, 64 * 1024 * 1024)
    tb = max(step, (budget // per_row) // step * step)
    tb = min(tb, _round_up(batch, step))
    return tb, per_row


def _swav_ce_kernel(q1_ref, q2_ref, c_ref, out_ref, *, inv_temp, scale):
    """One grid step = one (batch tile, unique crop) pair.

    Writes sum_{b,k} w * log_softmax(c / T)[b, k] * scale for this tile into
    its own lane-dense (1, 128) output block (no cross-step accumulation).
    """
    i = pl.program_id(1)  # crop index (innermost, "arbitrary")

    # Per-crop weight: crop 0 (c1) uses q2, crop 1 (c2) uses q1,
    # every local crop uses q1 + q2.
    a1 = (i != 0).astype(jnp.float32)
    a2 = (i != 1).astype(jnp.float32)

    p = c_ref[...].astype(jnp.float32) * inv_temp                # [tb, K]
    m = jnp.max(p, axis=-1, keepdims=True)                       # [tb, 1]
    z = p - m
    lse = jnp.log(jnp.sum(jnp.exp(z), axis=-1, keepdims=True))   # [tb, 1]

    w = a1 * q1_ref[...].astype(jnp.float32) + a2 * q2_ref[...].astype(jnp.float32)

    # sum(w * (z - lse)) without materializing log_softmax:
    contrib = (jnp.sum(w * z)
               - jnp.sum(jnp.sum(w, axis=-1, keepdims=True) * lse)) * scale

    out_ref[...] = jnp.broadcast_to(contrib, out_ref.shape).astype(out_ref.dtype)


def swav_loss(c, q, *, num_crops, temperature=0.1):
    """JAX/Pallas equivalent of SwAVLoss.forward.

    c: either (c1, c2, c_c) with c1, c2 of shape [B, K] and c_c a tuple of
       [B, K] arrays, or a pre-stacked [NC, B, K] array (crop order
       c1, c2, *c_c) to avoid the wrapper-side stack copy.
    q: (q1, q2), each [B, K].
    """
    q1, q2 = q
    if isinstance(c, (tuple, list)):
        c1, c2, c_c = c
        # TODO(synk): this stack is an extra HBM copy of the crop set; pass a
        # pre-stacked [NC, B, K] array when the producer can emit it.
        C = jnp.stack((c1, c2) + tuple(c_c))
    else:
        C = c
    NC, B, K = C.shape

    vmem_cap = _vmem_capacity_bytes()
    itemsizes = (jnp.dtype(C.dtype).itemsize,
                 jnp.dtype(q1.dtype).itemsize,
                 jnp.dtype(q2.dtype).itemsize)
    tb, per_row = _pick_batch_tile(B, K, itemsizes, vmem_cap)

    nbt = pl.cdiv(B, tb)
    b_pad = nbt * tb
    if b_pad != B:
        # Zero-padded rows contribute exactly 0 (w rows are all-zero).
        pad = b_pad - B
        C = jnp.pad(C, ((0, 0), (0, pad), (0, 0)))
        q1 = jnp.pad(q1, ((0, pad), (0, 0)))
        q2 = jnp.pad(q2, ((0, pad), (0, 0)))

    # mean_b -> sum_b with 1/B folded in; also 1/(num_crops-1) and the final 1/2.
    scale = 1.0 / (float(B) * float(num_crops - 1) * 2.0)
    inv_temp = 1.0 / float(temperature)

    footprint = tb * per_row
    vmem_limit = int(min(vmem_cap * 7 // 8, footprint + (16 << 20)))
    vmem_limit = max(min(vmem_limit, vmem_cap), 32 << 20)

    kernel = functools.partial(_swav_ce_kernel, inv_temp=inv_temp, scale=scale)

    out = pl.pallas_call(
        kernel,
        out_shape=jax.ShapeDtypeStruct((nbt, NC, 1, _LANES), jnp.float32),
        grid_spec=pltpu.PrefetchScalarGridSpec(
            num_scalar_prefetch=0,
            grid=(nbt, NC),
            in_specs=[
                # q1 / q2 blocks are invariant along the crop axis -> each is
                # DMA'd once per batch tile (consecutive crops reuse them).
                pl.BlockSpec((tb, K), lambda j, i: (j, 0)),
                pl.BlockSpec((tb, K), lambda j, i: (j, 0)),
                # Unique crop assignment block.
                pl.BlockSpec((None, tb, K), lambda j, i: (i, j, 0)),
            ],
            # One independent lane-dense partial per (batch tile, crop).
            out_specs=pl.BlockSpec((None, None, 1, _LANES),
                                   lambda j, i: (j, i, 0, 0)),
        ),
        compiler_params=pltpu.CompilerParams(
            dimension_semantics=("parallel", "arbitrary"),
            vmem_limit_bytes=vmem_limit,
        ),
    )(q1, q2, C)

    return jnp.sum(out[:, :, 0, 0])


def swav_loss_ref(c, q, *, num_crops, temperature=0.1):
    """Pure-JAX reference mirroring the PyTorch code."""
    c1, c2, c_c = c
    q1, q2 = q

    def ce(qq, pp):
        return jnp.mean(jnp.sum(qq * jax.nn.log_softmax(pp, axis=1), axis=1))

    loss = 0.0
    p1, p2 = c1 / temperature, c2 / temperature
    loss += ce(q1, p2) / (num_crops - 1)
    loss += ce(q2, p1) / (num_crops - 1)
    for cc in c_c:
        p = cc / temperature
        loss += ce(q1, p) / (num_crops - 1)
        loss += ce(q2, p) / (num_crops - 1)
    return loss / 2


if __name__ == "__main__":
    key = jax.random.PRNGKey(0)
    B, K = 8, 128          # batch, num prototypes
    num_crops = 4          # -> 2 extra "local" crops in c_c
    temperature = 0.1

    keys = jax.random.split(key, 6)
    c1 = jax.random.normal(keys[0], (B, K), jnp.float32)
    c2 = jax.random.normal(keys[1], (B, K), jnp.float32)
    c_c = (
        jax.random.normal(keys[2], (B, K), jnp.float32),
        jax.random.normal(keys[3], (B, K), jnp.float32),
    )
    # Code assignments: rows on the simplex (as Sinkhorn codes would be).
    q1 = jax.nn.softmax(jax.random.normal(keys[4], (B, K), jnp.float32), axis=1)
    q2 = jax.nn.softmax(jax.random.normal(keys[5], (B, K), jnp.float32), axis=1)

    # f32 wire: must match the PyTorch-semantics reference tightly.
    loss = swav_loss((c1, c2, c_c), (q1, q2),
                     num_crops=num_crops, temperature=temperature)
    loss = jax.block_until_ready(loss)
    ref = swav_loss_ref((c1, c2, c_c), (q1, q2),
                        num_crops=num_crops, temperature=temperature)
    assert jnp.allclose(loss, ref, rtol=1e-4, atol=1e-4), (loss, ref)

    # bf16 wire (halves HBM traffic) with a pre-stacked crop slab; compared
    # against the reference evaluated on the same bf16-rounded inputs.
    to_bf = lambda x: x.astype(jnp.bfloat16)
    C_bf = jnp.stack((to_bf(c1), to_bf(c2)) + tuple(to_bf(x) for x in c_c))
    loss_bf = swav_loss(C_bf, (to_bf(q1), to_bf(q2)),
                        num_crops=num_crops, temperature=temperature)
    loss_bf = jax.block_until_ready(loss_bf)
    c_bf_f32 = tuple(x.astype(jnp.float32) for x in (c1, c2) + c_c)
    ref_bf = swav_loss_ref(
        (to_bf(c1).astype(jnp.float32), to_bf(c2).astype(jnp.float32),
         tuple(to_bf(x).astype(jnp.float32) for x in c_c)),
        (to_bf(q1).astype(jnp.float32), to_bf(q2).astype(jnp.float32)),
        num_crops=num_crops, temperature=temperature)
    assert jnp.allclose(loss_bf, ref_bf, rtol=2e-3, atol=2e-3), (loss_bf, ref_bf)

    print("KERNEL_OK")
</pallas_src>

<mosaic_0001>
module attributes {stable_mosaic.version = 11 : i64} {
  func.func @_swav_ce_kernel(%arg0: i32, %arg1: i32, %arg2: memref<8x128xf32, #tpu.memory_space<vmem>>, %arg3: memref<8x128xf32, #tpu.memory_space<vmem>>, %arg4: memref<1x8x128xf32, #tpu.memory_space<vmem>>, %arg5: memref<1x1x1x128xf32, #tpu.memory_space<vmem>>) attributes {dimension_semantics = [#tpu.dimension_semantics<parallel>, #tpu.dimension_semantics<arbitrary>], iteration_bounds = array<i64: 1, 4>, scalar_prefetch = 0 : i64, scratch_operands = 0 : i64, tpu.core_type = #tpu.core_type<tc>, window_params = [{transform_indices = @transform_0, window_bounds = array<i64: 8, 128>}, {transform_indices = @transform_1, window_bounds = array<i64: 8, 128>}, {transform_indices = @transform_2, window_bounds = array<i64: 1, 8, 128>}, {transform_indices = @transform_3, window_bounds = array<i64: 1, 1, 1, 128>}]} {
    %c0_i32 = arith.constant 0 : i32
    %0 = arith.cmpi ne, %arg1, %c0_i32 : i32
    %1 = arith.extui %0 : i1 to i32
    %2 = arith.sitofp %1 : i32 to f32
    %c1_i32 = arith.constant 1 : i32
    %3 = arith.cmpi ne, %arg1, %c1_i32 : i32
    %4 = arith.extui %3 : i1 to i32
    %5 = arith.sitofp %4 : i32 to f32
    %c0 = arith.constant 0 : index
    %c0_0 = arith.constant 0 : index
    %c0_1 = arith.constant 0 : index
    %6 = vector.load %arg4[%c0, %c0_0, %c0_1] : memref<1x8x128xf32, #tpu.memory_space<vmem>>, vector<1x8x128xf32>
    %7 = vector.shape_cast %6 : vector<1x8x128xf32> to vector<8x128xf32>
    %cst = arith.constant 1.000000e+01 : f32
    %8 = vector.broadcast %cst : f32 to vector<8x128xf32>
    %9 = arith.mulf %7, %8 : vector<8x128xf32>
    %cst_2 = arith.constant dense<0xFF800000> : vector<8xf32>
    %10 = vector.multi_reduction <maximumf>, %9, %cst_2 [1] : vector<8x128xf32> to vector<8xf32>
    %11 = vector.shape_cast %10 : vector<8xf32> to vector<8x1xf32>
    %12 = vector.broadcast %11 : vector<8x1xf32> to vector<8x128xf32>
    %13 = arith.subf %9, %12 : vector<8x128xf32>
    %14 = math.exp %13 : vector<8x128xf32>
    %cst_3 = arith.constant dense<0.000000e+00> : vector<8xf32>
    %15 = vector.multi_reduction <add>, %14, %cst_3 [1] : vector<8x128xf32> to vector<8xf32>
    %16 = vector.shape_cast %15 : vector<8xf32> to vector<8x1xf32>
    %17 = math.log %16 : vector<8x1xf32>
    %c0_4 = arith.constant 0 : index
    %c0_5 = arith.constant 0 : index
    %18 = vector.load %arg2[%c0_4, %c0_5] : memref<8x128xf32, #tpu.memory_space<vmem>>, vector<8x128xf32>
    %19 = vector.broadcast %2 : f32 to vector<8x128xf32>
    %20 = arith.mulf %19, %18 : vector<8x128xf32>
    %c0_6 = arith.constant 0 : index
    %c0_7 = arith.constant 0 : index
    %21 = vector.load %arg3[%c0_6, %c0_7] : memref<8x128xf32, #tpu.memory_space<vmem>>, vector<8x128xf32>
    %22 = vector.broadcast %5 : f32 to vector<8x128xf32>
    %23 = arith.mulf %22, %21 : vector<8x128xf32>
    %24 = arith.addf %20, %23 : vector<8x128xf32>
    %25 = arith.mulf %24, %13 : vector<8x128xf32>
    %26 = vector.shape_cast %25 : vector<8x128xf32> to vector<1x8x128xf32>
    %cst_8 = arith.constant dense<0.000000e+00> : vector<1xf32>
    %27 = vector.multi_reduction <add>, %26, %cst_8 [1, 2] : vector<1x8x128xf32> to vector<1xf32>
    %28 = vector.shape_cast %27 : vector<1xf32> to vector<1x1x1xf32>
    %29 = vector.extract %28[0, 0, 0] : f32 from vector<1x1x1xf32>
    %cst_9 = arith.constant dense<0.000000e+00> : vector<8xf32>
    %30 = vector.multi_reduction <add>, %24, %cst_9 [1] : vector<8x128xf32> to vector<8xf32>
    %31 = vector.shape_cast %30 : vector<8xf32> to vector<8x1xf32>
    %32 = arith.mulf %31, %17 : vector<8x1xf32>
    %33 = vector.shape_cast %32 : vector<8x1xf32> to vector<1x8x1xf32>
    %cst_10 = arith.constant dense<0.000000e+00> : vector<1xf32>
    %34 = vector.multi_reduction <add>, %33, %cst_10 [1, 2] : vector<1x8x1xf32> to vector<1xf32>
    %35 = vector.shape_cast %34 : vector<1xf32> to vector<1x1x1xf32>
    %36 = vector.extract %35[0, 0, 0] : f32 from vector<1x1x1xf32>
    %37 = arith.subf %29, %36 : f32
    %cst_11 = arith.constant 0.020833334 : f32
    %38 = arith.mulf %37, %cst_11 : f32
    %39 = vector.broadcast %38 : f32 to vector<1x128xf32>
    %c0_12 = arith.constant 0 : index
    %c0_13 = arith.constant 0 : index
    %c0_14 = arith.constant 0 : index
    %c0_15 = arith.constant 0 : index
    %40 = vector.load %arg5[%c0_12, %c0_13, %c0_14, %c0_15] : memref<1x1x1x128xf32, #tpu.memory_space<vmem>>, vector<1x1x1x128xf32>
    %41 = vector.shape_cast %40 : vector<1x1x1x128xf32> to vector<1x128xf32>
    %42 = vector.shape_cast %39 : vector<1x128xf32> to vector<1x1x1x128xf32>
    tpu.vector_store %arg5[%c0_12, %c0_13, %c0_14, %c0_15], %42 {strides = array<i32>} : memref<1x1x1x128xf32, #tpu.memory_space<vmem>>, vector<1x1x1x128xf32>,
    return
  }
  func.func @transform_0(%arg0: i32, %arg1: i32) -> (i32, i32) {
    %c0_i32 = arith.constant 0 : i32
    %c0_i32_0 = arith.constant 0 : i32
    return %arg0, %c0_i32 : i32, i32
  }
  func.func @transform_1(%arg0: i32, %arg1: i32) -> (i32, i32) {
    %c0_i32 = arith.constant 0 : i32
    %c0_i32_0 = arith.constant 0 : i32
    return %arg0, %c0_i32 : i32, i32
  }
  func.func @transform_2(%arg0: i32, %arg1: i32) -> (i32, i32, i32) {
    %c0_i32 = arith.constant 0 : i32
    %c0_i32_0 = arith.constant 0 : i32
    return %arg1, %arg0, %c0_i32 : i32, i32, i32
  }
  func.func @transform_3(%arg0: i32, %arg1: i32) -> (i32, i32, i32, i32) {
    %c0_i32 = arith.constant 0 : i32
    %c0_i32_0 = arith.constant 0 : i32
    %c0_i32_1 = arith.constant 0 : i32
    return %arg0, %arg1, %c0_i32, %c0_i32_0 : i32, i32, i32, i32
  }
}

</mosaic_0001>

<llo_original>
// kernel: tpu_custom_call.1
$region0: #{tpu_custom_call.1}
  #allocation0 [shape = 'u32[]', space=smem, size = 0x4, offset = 0x4, fixed_abs, tag = 'smem constant byte address 0x4 - core index']
  #allocation1 [shape = 'u32[72,128]{1,0:T(1,128)}', space=vmem, size = 0x9000, scoped, tag = 'internal scratch']
  %s0 = inlined_call_operand.hbm [shape: f32[8,128], index: 0, kind: input, shape index: {}]
  %s1 = inlined_call_operand.hbm [shape: f32[8,128], index: 1, kind: input, shape index: {}]
  %s2 = inlined_call_operand.hbm [shape: f32[4,8,128], index: 2, kind: input, shape index: {}]
  %s3 = inlined_call_operand.hbm [shape: f32[1,4,1,128], index: 3, kind: output, shape index: {}]
  %s4 = sld [smem:[#allocation0]]
  $region57: #{tpu_custom_call.1} parent=0
    _
  %s6 = ssub.s32 1, %s4
  %s7 = scalar_select 0, %s6, %s4
  $region1: #{tpu_custom_call.1} parent=0
    #allocation2 [shape = 'u8[4096]{0}', space=vmem, size = 0x1000, scoped, tag = 'input window, operand 0, single buffered']
    #allocation3 [shape = 's32[2]{0}', space=sflag, size = 0x8, scoped, tag = 'scoped memory for tpu_custom_call.1']
    #allocation4 [shape = 's32[2]{0}', space=sflag, size = 0x8, scoped, tag = 'scoped memory for tpu_custom_call.1']
    #allocation5 [shape = 'u8[4096]{0}', space=vmem, size = 0x1000, scoped, tag = 'input window, operand 1, single buffered']
    #allocation6 [shape = 's32[1]{0}', space=sflag, size = 0x4, scoped, tag = 'scoped memory for tpu_custom_call.1']
    #allocation7 [shape = 'u8[8192]{0}', space=vmem, size = 0x2000, scoped, tag = 'input window, operand 2']
    #allocation8 [shape = 'u8[1024]{0}', space=vmem, size = 0x400, scoped, tag = 'output window, operand 0']
    %8 = vsyncpa [#allocation3], 0
    %9 = vsyncpa [#allocation6], 0
    %10 = vsyncpa [#allocation4], 0
    %s11 = scalar_lea.sflag [#allocation4], 1
    %12 = vsyncpa %s11, 0
    loop: start=0, step=1, limit=6
    $region2: #{tpu_custom_call.1} parent=1 // loop_pre_header
      _
    $region3: #{tpu_custom_call.1} parent=1 // loop_header
      %s14 = sphi 0, %s18
      %p15 = scmp.ge.s32.totalorder %s14, 6
      %s21 = sphi 0, %s33
      %s22 = sphi 0, %s29
      %s23 = sphi 0, %s21
      %s24 = sphi 0, %s22
      %s25 = sphi 0, %s23
      %s26 = sphi 0, %s24
      %s36 = sphi 0, %s38
      %s39 = sphi 0, %s36
      %s40 = sphi 0, %s39
      %s56 = sphi 0, %s40
      %s62 = sphi 0, %s64
      %s65 = sphi 0, %s62
      %s66 = sphi 0, %s65
      %s82 = sphi 0, %s66
      %s90 = sphi 0, %s92
      %s93 = sphi 0, %s90
      %s94 = sphi 0, %s93
      %s110 = sphi 0, %s94
      %s118 = sphi 0, %s120
      %s121 = sphi 0, %s118
      %s122 = sphi 0, %s121
      %s138 = sphi 0, %s122
    $region4: #{tpu_custom_call.1} parent=1 // loop_header_branch
      %17 = sbr.rel (%p15) target = $region8
    $region5: #{tpu_custom_call.1} parent=1 // loop_body
      %s19 = ssub.s32 %s14, 1
      %s20 = ssub.s32 %s14, 2
      %s27 = sadd.s32 1, %s22
      %p28 = scmp.ge.s32.totalorder %s27, 4
      %s29 = scalar_select %p28, 0, %s27
      %s30 = sadd.s32 1, %s21
      %s31 = scalar_select %p28, %s30, %s21
      %p32 = scmp.ge.s32.totalorder %s31, 1
      %s33 = scalar_select %p32, 0, %s31
      %s34 = ssub.s32 %s21, %s33
      %p35 = scmp.eq.s32.totalorder %s34, 0
      %s37 = sadd.s32 %s36, 1
      %s38 = scalar_select %p35, %s36, %s37
      %p41 = pneg %p35
      %p42 = scmp.eq.s32.totalorder %s14, 3
      %p43 = por %p41, %p42
      %p44 = scmp.ne.s32.totalorder %s36, %s39
      %p45 = scmp.eq.s32.totalorder %s14, 0
      %p46 = por %p44, %p45
      %p47 = scmp.ne.s32.totalorder %s36, %s39
      %p48 = scmp.eq.s32.totalorder %s19, 3
      %p49 = por %p47, %p48
      %p50 = scmp.ne.s32.totalorder %s39, %s40
      %p51 = scmp.eq.s32.totalorder %s19, 0
      %p52 = por %p50, %p51
      %p53 = scmp.ne.s32.totalorder %s39, %s40
      %p54 = scmp.eq.s32.totalorder %s20, 3
      %p55 = por %p53, %p54
      %p57 = scmp.ne.s32.totalorder %s40, %s56
      %p58 = scmp.eq.s32.totalorder %s20, 0
      %p59 = por %p57, %p58
      %s60 = ssub.s32 %s21, %s33
      %p61 = scmp.eq.s32.totalorder %s60, 0
      %s63 = sadd.s32 %s62, 1
      %s64 = scalar_select %p61, %s62, %s63
      %p67 = pneg %p61
      %p68 = scmp.eq.s32.totalorder %s14, 3
      %p69 = por %p67, %p68
      %p70 = scmp.ne.s32.totalorder %s62, %s65
      %p71 = scmp.eq.s32.totalorder %s14, 0
      %p72 = por %p70, %p71
      %p73 = scmp.ne.s32.totalorder %s62, %s65
      %p74 = scmp.eq.s32.totalorder %s19, 3
      %p75 = por %p73, %p74
      %p76 = scmp.ne.s32.totalorder %s65, %s66
      %p77 = scmp.eq.s32.totalorder %s19, 0
      %p78 = por %p76, %p77
      %p79 = scmp.ne.s32.totalorder %s65, %s66
      %p80 = scmp.eq.s32.totalorder %s20, 3
      %p81 = por %p79, %p80
      %p83 = scmp.ne.s32.totalorder %s66, %s82
      %p84 = scmp.eq.s32.totalorder %s20, 0
      %p85 = por %p83, %p84
      %s86 = ssub.s32 %s22, %s29
      %s87 = ssub.s32 %s21, %s33
      %s88 = sor.u32 %s86, %s87
      %p89 = scmp.eq.s32.totalorder %s88, 0
      %s91 = sadd.s32 %s90, 1
      %s92 = scalar_select %p89, %s90, %s91
      %p95 = pneg %p89
      %p96 = scmp.eq.s32.totalorder %s14, 3
      %p97 = por %p95, %p96
      %p98 = scmp.ne.s32.totalorder %s90, %s93
      %p99 = scmp.eq.s32.totalorder %s14, 0
      %p100 = por %p98, %p99
      %p101 = scmp.ne.s32.totalorder %s90, %s93
      %p102 = scmp.eq.s32.totalorder %s19, 3
      %p103 = por %p101, %p102
      %p104 = scmp.ne.s32.totalorder %s93, %s94
      %p105 = scmp.eq.s32.totalorder %s19, 0
      %p106 = por %p104, %p105
      %p107 = scmp.ne.s32.totalorder %s93, %s94
      %p108 = scmp.eq.s32.totalorder %s20, 3
      %p109 = por %p107, %p108
      %p111 = scmp.ne.s32.totalorder %s94, %s110
      %p112 = scmp.eq.s32.totalorder %s20, 0
      %p113 = por %p111, %p112
      %s114 = ssub.s32 %s21, %s33
      %s115 = ssub.s32 %s22, %s29
      %s116 = sor.u32 %s114, %s115
      %p117 = scmp.eq.s32.totalorder %s116, 0
      %s119 = sadd.s32 %s118, 1
      %s120 = scalar_select %p117, %s118, %s119
      %p123 = pneg %p117
      %p124 = scmp.eq.s32.totalorder %s14, 3
      %p125 = por %p123, %p124
      %p126 = scmp.ne.s32.totalorder %s118, %s121
      %p127 = scmp.eq.s32.totalorder %s14, 0
      %p128 = por %p126, %p127
      %p129 = scmp.ne.s32.totalorder %s118, %s121
      %p130 = scmp.eq.s32.totalorder %s19, 3
      %p131 = por %p129, %p130
      %p132 = scmp.ne.s32.totalorder %s121, %s122
      %p133 = scmp.eq.s32.totalorder %s19, 0
      %p134 = por %p132, %p133
      %p135 = scmp.ne.s32.totalorder %s121, %s122
      %p136 = scmp.eq.s32.totalorder %s20, 3
      %p137 = por %p135, %p136
      %p139 = scmp.ne.s32.totalorder %s122, %s138
      %p140 = scmp.eq.s32.totalorder %s20, 0
      %p141 = por %p139, %p140
      %p142 = scmp.le.s32.totalorder 1, %s14
      %p143 = scmp.lt.s32.totalorder %s14, 5
      %p144 = pnand %p142, %p143
      %p145 = pneg %p144
      // Predicated region
      $region9: #{tpu_custom_call.1} parent=5 // pred_check
        _
      $region10: #{tpu_custom_call.1} parent=5 // pred_check_branch
        %147 = sbr.rel (%p144) target = $region12
      $region11: #{tpu_custom_call.1} parent=5 // pred_region
        %s148 = ssub.s32 %s14, 1
        // Predicated region
        $region13: #{tpu_custom_call.1} parent=11 // pred_check
          %p149 = pneg %p52
        $region14: #{tpu_custom_call.1} parent=11 // pred_check_branch
          %151 = sbr.rel (%p149) target = $region16
        $region15: #{tpu_custom_call.1} parent=11 // pred_region
          %153 = vsyncadd [#allocation3], 0
          %s154 = smul.addr %s23, 8
          %s155 = scalar_lea.hbm %s0, %s154
          %s157 = sshll.u32 %s155, 4
          %s158 = int_to_ptr.hbm [resolvable:$true] %s157
          %s159 = sshll.u32 [#allocation2], 4
          %s160 = int_to_ptr.vmem [resolvable:$true] %s159
          %162 = dma.hbm_to_vmem [thread:$0]  %s158, 128, %s160, [#allocation3]
        $region16: #{tpu_custom_call.1} parent=11 // pred_fallthru
          _
        // Predicated region
        $region17: #{tpu_custom_call.1} parent=11 // pred_check
          %p163 = pneg %p78
        $region18: #{tpu_custom_call.1} parent=11 // pred_check_branch
          %165 = sbr.rel (%p163) target = $region20
        $region19: #{tpu_custom_call.1} parent=11 // pred_region
          %167 = vsyncadd [#allocation6], 0
          %s168 = smul.addr %s23, 8
          %s169 = scalar_lea.hbm %s1, %s168
          %s171 = sshll.u32 %s169, 4
          %s172 = int_to_ptr.hbm [resolvable:$true] %s171
          %s173 = sshll.u32 [#allocation5], 4
          %s174 = int_to_ptr.vmem [resolvable:$true] %s173
          %176 = dma.hbm_to_vmem [thread:$0]  %s172, 128, %s174, [#allocation6]
        $region20: #{tpu_custom_call.1} parent=11 // pred_fallthru
          _
      $region12: #{tpu_custom_call.1} parent=5 // pred_fallthru
        _
      %p177 = scmp.lt.s32.totalorder %s14, 4
      // Predicated region
      $region21: #{tpu_custom_call.1} parent=5 // pred_check
        %p178 = pneg %p177
      $region22: #{tpu_custom_call.1} parent=5 // pred_check_branch
        %180 = sbr.rel (%p178) target = $region24
      $region23: #{tpu_custom_call.1} parent=5 // pred_region
        // Predicated region
        $region25: #{tpu_custom_call.1} parent=23 // pred_check
          %p181 = pneg %p100
        $region26: #{tpu_custom_call.1} parent=23 // pred_check_branch
          %183 = sbr.rel (%p181) target = $region28
        $region27: #{tpu_custom_call.1} parent=23 // pred_region
          %s184 = sand.u32 %s14, 1
          %s185 = scalar_lea.sflag [#allocation3], %s184
          %s186 = sand.u32 %s90, 1
          %s187 = smul.addr %s186, 8
          %s188 = scalar_lea.vmem [#allocation7], %s187
          %190 = vsyncadd %s185, 0
          %s191 = sadd.s32 %s21, %s22
          %s192 = smul.addr %s191, 8
          %s193 = scalar_lea.hbm %s2, %s192
          %s195 = sshll.u32 %s193, 4
          %s196 = int_to_ptr.hbm [resolvable:$true] %s195
          %s197 = sshll.u32 %s188, 4
          %s198 = int_to_ptr.vmem [resolvable:$true] %s197
          %200 = dma.hbm_to_vmem [thread:$0]  %s196, 128, %s198, %s185
        $region28: #{tpu_custom_call.1} parent=23 // pred_fallthru
          _
      $region24: #{tpu_custom_call.1} parent=5 // pred_fallthru
        _
      %p201 = scmp.le.s32.totalorder 1, %s14
      %p202 = scmp.lt.s32.totalorder %s14, 5
      %p203 = pnand %p201, %p202
      %p204 = pneg %p203
      // Predicated region
      $region29: #{tpu_custom_call.1} parent=5 // pred_check
        _
      $region30: #{tpu_custom_call.1} parent=5 // pred_check_branch
        %206 = sbr.rel (%p203) target = $region32
      $region31: #{tpu_custom_call.1} parent=5 // pred_region
        %s207 = ssub.s32 %s14, 1
        // Predicated region
        $region33: #{tpu_custom_call.1} parent=31 // pred_check
          %p208 = pneg %p52
        $region34: #{tpu_custom_call.1} parent=31 // pred_check_branch
          %210 = sbr.rel (%p208) target = $region36
        $region35: #{tpu_custom_call.1} parent=31 // pred_region
          %212 = dma.done [#allocation3], 128
        $region36: #{tpu_custom_call.1} parent=31 // pred_fallthru
          _
        // Predicated region
        $region37: #{tpu_custom_call.1} parent=31 // pred_check
          %p213 = pneg %p78
        $region38: #{tpu_custom_call.1} parent=31 // pred_check_branch
          %215 = sbr.rel (%p213) target = $region40
        $region39: #{tpu_custom_call.1} parent=31 // pred_region
          %217 = dma.done [#allocation6], 128
        $region40: #{tpu_custom_call.1} parent=31 // pred_fallthru
          _
        %s218 = sand.u32 %s19, 1
        %s219 = scalar_lea.sflag [#allocation3], %s218
        %s220 = sand.u32 %s93, 1
        %s221 = smul.addr %s220, 8
        %s222 = scalar_lea.vmem [#allocation7], %s221
        // Predicated region
        $region41: #{tpu_custom_call.1} parent=31 // pred_check
          %p223 = pneg %p106
        $region42: #{tpu_custom_call.1} parent=31 // pred_check_branch
          %225 = sbr.rel (%p223) target = $region44
        $region43: #{tpu_custom_call.1} parent=31 // pred_region
          %227 = dma.done %s219, 128
        $region44: #{tpu_custom_call.1} parent=31 // pred_fallthru
          _
        %p228 = pneg %p52
        %p229 = pneg %p49
        %p230 = pneg %p78
        %p231 = pneg %p75
        %s232 = sand.u32 %s19, 1
        %s233 = scalar_lea.sflag [#allocation3], %s232
        %s234 = sand.u32 %s93, 1
        %s235 = smul.addr %s234, 8
        %s236 = scalar_lea.vmem [#allocation7], %s235
        %p237 = pneg %p106
        %p238 = pneg %p103
        %p239 = pneg %p134
        %p240 = pneg %p131
        %s241 = sand.u32 %s121, 1
        %s242 = scalar_lea.sflag [#allocation4], %s241
        %s243 = sand.u32 %s121, 1
        %s244 = scalar_lea.vmem [#allocation8], %s243
        %p245 = scmp.ne.s32.totalorder %s24, 0
        %s246 = scalar_select %p245, 1, 0
        %s247 = scvt.s32.f32 %s246
        %p248 = scmp.ne.s32.totalorder %s24, 1
        %s249 = scalar_select %p248, 1, 0
        %s250 = scvt.s32.f32 %s249
        %v251 = vld [vmem:[%s222] sm:$0xff]
        %v252 = vmul.f32 %v251, 10.0
        %253 = vmax.xlane.f32.xlu0 %v252
        %v254 = vpop.xlane.xlu0 %253
        %v255 = vsub.f32 %v252, %v254
        %v256 = vmul.f32 %v255, 1.442695
        %v257 = vpow.pop %v256
        %258 = vadd.xlane.f32.xlu0 %v257
        %v259 = vpop.xlane.xlu0 %258
        %v260 = vlog2.pop %v259
        %v261 = vmul.f32 %v260, 0.6931472
        %v262 = vld [vmem:[#allocation2] sm:$0xff]
        %v263 = vstv %s247
        %v264 = vmul.f32 %v263, %v262
        %v265 = vld [vmem:[#allocation5] sm:$0xff]
        %v266 = vstv %s250
        %v267 = vmul.f32 %v266, %v265
        %v268 = vadd.f32 %v264, %v267
        %v269 = vmul.f32 %v268, %v255
        %270 = vadd.xlane.f32.xlu0 %v269
        %v271 = vpop.xlane.xlu0 %270
        %v272 = vrot.slane %v271, 4
        %v273 = vadd.f32 %v271, %v272
        %v274 = vrot.slane %v273, 2
        %v275 = vadd.f32 %v273, %v274
        %v276 = vrot.slane %v275, 1
        %v277 = vadd.f32 %v275, %v276
        %s278 = vtos %v277
        %279 = vadd.xlane.f32.xlu0 %v268
        %v280 = vpop.xlane.xlu0 %279
        %v281 = vmul.f32 %v280, %v261
        %vm282 = vcmask 7168
        %v283 = vsel %vm282, %v281, 0.0
        %284 = vadd.xlane.f32.xlu0 %v283
        %v285 = vpop.xlane.xlu0 %284
        %v286 = vrot.slane %v285, 4
        %v287 = vadd.f32 %v285, %v286
        %v288 = vrot.slane %v287, 2
        %v289 = vadd.f32 %v287, %v288
        %v290 = vrot.slane %v289, 1
        %v291 = vadd.f32 %v289, %v290
        %s292 = vtos %v291
        %s293 = ssub.f32 %s278, %s292
        %s294 = smul.f32 %s293, 0.020833334
        %v295 = vstv %s294
        %296 = vst [vmem:[%s244] sm:$0x1] %v295
        %s297 = sand.u32 %s121, 1
        %s298 = scalar_lea.sflag [#allocation4], %s297
        %s299 = sand.u32 %s121, 1
        %s300 = scalar_lea.vmem [#allocation8], %s299
        // Predicated region
        $region45: #{tpu_custom_call.1} parent=31 // pred_check
          %p301 = pneg %p131
        $region46: #{tpu_custom_call.1} parent=31 // pred_check_branch
          %303 = sbr.rel (%p301) target = $region48
        $region47: #{tpu_custom_call.1} parent=31 // pred_region
          %305 = vsyncadd %s298, 0
          %s306 = smul.addr %s23, 4
          %s307 = sadd.s32 %s24, %s306
          %s308 = scalar_lea.hbm %s3, %s307
          %s310 = sshll.u32 %s300, 4
          %s311 = int_to_ptr.vmem [resolvable:$true] %s310
          %s312 = sshll.u32 %s308, 4
          %s313 = int_to_ptr.hbm [resolvable:$true] %s312
          %315 = dma.vmem_to_hbm [thread:$0]  %s311, 16, %s313, %s298
        $region48: #{tpu_custom_call.1} parent=31 // pred_fallthru
          _
      $region32: #{tpu_custom_call.1} parent=5 // pred_fallthru
        _
      %p316 = scmp.le.s32.totalorder 2, %s14
      // Predicated region
      $region49: #{tpu_custom_call.1} parent=5 // pred_check
        %p317 = pneg %p316
      $region50: #{tpu_custom_call.1} parent=5 // pred_check_branch
        %319 = sbr.rel (%p317) target = $region52
      $region51: #{tpu_custom_call.1} parent=5 // pred_region
        %s320 = ssub.s32 %s14, 2
        // Predicated region
        $region53: #{tpu_custom_call.1} parent=51 // pred_check
          %p321 = pneg %p137
        $region54: #{tpu_custom_call.1} parent=51 // pred_check_branch
          %323 = sbr.rel (%p321) target = $region56
        $region55: #{tpu_custom_call.1} parent=51 // pred_region
          %s324 = sand.u32 %s122, 1
          %s325 = scalar_lea.sflag [#allocation4], %s324
          %s326 = sand.u32 %s122, 1
          %s327 = scalar_lea.vmem [#allocation8], %s326
          %329 = dma.done %s325, 16
        $region56: #{tpu_custom_call.1} parent=51 // pred_fallthru
          _
      $region52: #{tpu_custom_call.1} parent=5 // pred_fallthru
        _
    $region6: #{tpu_custom_call.1} parent=1 // loop_footer
      %s18 = sadd.s32 1, %s14
    $region7: #{tpu_custom_call.1} parent=1 // loop_footer_branch
      %13 = sbr.rel target = $region3
    $region8: #{tpu_custom_call.1} parent=1 // loop_exit
      _
    %330 = vsyncpa [#allocation3], 1
    %s331 = scalar_lea.sflag [#allocation3], 1
    %332 = vsyncpa %s331, 1
    %333 = vsyncpa [#allocation6], 1
    %334 = vsyncpa [#allocation4], 1
    %s335 = scalar_lea.sflag [#allocation4], 1
    %336 = vsyncpa %s335, 1

</llo_original>
